<compile_context>
chip_gen: v5e
topology: v5e:2x2
jax: 0.10.0
libtpu: 0.0.40
codegen_flags: <defaults>
</compile_context>

<pallas_src>
import jax
import jax.numpy as jnp
from jax.experimental import pallas as pl
from jax.experimental.pallas import tpu as pltpu

LEAKY_SLOPE = 0.1
BN_EPS = 1e-5


def _pick_th(H, W, s_cap=512):
    """Row-tile TH dividing H.

    The flattened spatial block S = TH*W must be a multiple of 128 (lane-dense,
    unmasked stores) and is capped so the duplication matrix E4 (S, 4S) stays
    small.  If no such split exists (e.g. 13x13 / 26x26 / 52x52), use the full
    spatial extent, which is always a legal block (equals the full array dim).
    """
    candidates = [th for th in range(1, H)
                  if H % th == 0 and (th * W) % 128 == 0 and th * W <= s_cap]
    if candidates:
        return max(candidates)
    return H


def _upsample_conv_kernel(x_ref, w_ref, s_ref, b_ref, e4_ref, o_ref):
    # x_ref:  (1, Cin, S)     flattened NCHW input tile (S = TH*W)
    # w_ref:  (Cout, Cin)     1x1 conv weight (input dtype)
    # s_ref:  (Cout, 1)       folded BN scale (f32)
    # b_ref:  (Cout, 1)       folded BN bias  (f32)
    # e4_ref: (S, 4*S)        0/1 nearest-neighbour 2x2 duplication matrix
    # o_ref:  (1, Cout, 4*S)  flattened NCHW output tile (2*TH rows of width 2W)
    x = x_ref[0]                                                       # (Cin, S)
    y = jnp.dot(w_ref[...], x, preferred_element_type=jnp.float32)     # (Cout, S) conv on MXU
    y = y * s_ref[...] + b_ref[...]                                    # BN (eval), f32 accumulator
    y = jnp.maximum(y, LEAKY_SLOPE * y)                                # LeakyReLU(0.1)
    y = y.astype(o_ref.dtype)                                          # exact select => cast first
    z = jnp.dot(y, e4_ref[...], preferred_element_type=jnp.float32)    # (Cout, 4S) fused 2x2 dup
    o_ref[0] = z.astype(o_ref.dtype)                                   # one lane-dense store


def yolov3_upsample(x_nchw, conv_w, bn_gamma, bn_beta, bn_mean, bn_var):
    N, Cin, H, W = x_nchw.shape
    Cout = conv_w.shape[0]                       # conv_w: (Cout, Cin, 1, 1)
    dtype = x_nchw.dtype

    TH = _pick_th(H, W)
    S = TH * W
    NS = H // TH

    # Fold BatchNorm (eval mode): y = conv(x) * scale + bias.  Scale/bias stay f32
    # and are applied on the f32 accumulator (better bf16 fidelity than folding
    # scale into a low-precision weight cast).
    scale = (bn_gamma.astype(jnp.float32)
             / jnp.sqrt(bn_var.astype(jnp.float32) + BN_EPS))              # (Cout,)
    bias = bn_beta.astype(jnp.float32) - bn_mean.astype(jnp.float32) * scale
    w2d = conv_w.reshape(Cout, Cin).astype(dtype)
    scale2d = scale.reshape(Cout, 1)
    bias2d = bias.reshape(Cout, 1)

    # 0/1 duplication matrix for one tile: output column j of the flattened
    # (2*TH, 2*W) tile reads input element ((j // (2W)) // 2) * W + (j % (2W)) // 2.
    j = jnp.arange(4 * S)
    src = (j // (2 * W) // 2) * W + (j % (2 * W)) // 2                     # (4S,)
    e4 = (src[None, :] == jnp.arange(S)[:, None]).astype(dtype)            # (S, 4S)
    # TODO(synk): for very large full-spatial tiles with no 128-aligned row split
    # (e.g. 52x52), E4 grows quadratically; chunk the duplication in that regime.

    x_flat = x_nchw.reshape(N, Cin, H * W)        # free (contiguous) reshape

    isz = jnp.dtype(dtype).itemsize
    flops = 2 * N * H * W * Cin * Cout + 2 * N * Cout * H * W * 4 * S
    bytes_accessed = int(
        N * Cin * H * W * isz                 # input
        + Cout * Cin * isz                    # weights
        + S * 4 * S * isz                     # duplication matrix (fetched once)
        + N * Cout * 4 * H * W * isz          # output (2H x 2W)
    )

    out_flat = pl.pallas_call(
        _upsample_conv_kernel,
        out_shape=jax.ShapeDtypeStruct((N, Cout, 4 * H * W), dtype),
        grid_spec=pltpu.PrefetchScalarGridSpec(
            num_scalar_prefetch=0,
            grid=(N, NS),
            in_specs=[
                pl.BlockSpec((1, Cin, S), lambda n, s: (n, 0, s)),
                pl.BlockSpec((Cout, Cin), lambda n, s: (0, 0)),
                pl.BlockSpec((Cout, 1), lambda n, s: (0, 0)),
                pl.BlockSpec((Cout, 1), lambda n, s: (0, 0)),
                pl.BlockSpec((S, 4 * S), lambda n, s: (0, 0)),
            ],
            out_specs=pl.BlockSpec((1, Cout, 4 * S), lambda n, s: (n, 0, s)),
        ),
        compiler_params=pltpu.CompilerParams(
            dimension_semantics=("parallel", "parallel"),
        ),
        cost_estimate=pl.CostEstimate(
            flops=flops, transcendentals=0, bytes_accessed=bytes_accessed),
    )(x_flat, w2d, scale2d, bias2d, e4)

    return out_flat.reshape(N, Cout, 2 * H, 2 * W)   # free (contiguous) reshape


def _reference(x_nchw, conv_w, bn_gamma, bn_beta, bn_mean, bn_var):
    N, Cin, H, W = x_nchw.shape
    Cout = conv_w.shape[0]
    w = conv_w.reshape(Cout, Cin)
    y = jnp.einsum('nchw,dc->ndhw', x_nchw, w)
    scale = bn_gamma / jnp.sqrt(bn_var + BN_EPS)
    bias = bn_beta - bn_mean * scale
    y = y * scale[None, :, None, None] + bias[None, :, None, None]
    y = jnp.where(y >= 0, y, LEAKY_SLOPE * y)
    return jnp.repeat(jnp.repeat(y, 2, axis=2), 2, axis=3)


if __name__ == "__main__":
    key = jax.random.PRNGKey(0)
    N, Cin, H, W = 2, 4, 16, 16
    Cout = Cin // 2

    k1, k2, k3, k4, k5, k6 = jax.random.split(key, 6)
    x = jax.random.normal(k1, (N, Cin, H, W), dtype=jnp.float32)
    conv_w = 0.1 * jax.random.normal(k2, (Cout, Cin, 1, 1), dtype=jnp.float32)
    bn_gamma = 1.0 + 0.1 * jax.random.normal(k3, (Cout,), dtype=jnp.float32)
    bn_beta = 0.1 * jax.random.normal(k4, (Cout,), dtype=jnp.float32)
    bn_mean = 0.1 * jax.random.normal(k5, (Cout,), dtype=jnp.float32)
    bn_var = jnp.abs(jax.random.normal(k6, (Cout,), dtype=jnp.float32)) + 0.5

    out = yolov3_upsample(x, conv_w, bn_gamma, bn_beta, bn_mean, bn_var)
    out = jax.block_until_ready(out)

    ref = _reference(x, conv_w, bn_gamma, bn_beta, bn_mean, bn_var)
    assert out.shape == (N, Cout, 2 * H, 2 * W), out.shape
    assert jnp.allclose(out, ref, atol=1e-4, rtol=1e-4), \
        float(jnp.max(jnp.abs(out - ref)))
    print("KERNEL_OK")
</pallas_src>

<mosaic_0001>
module attributes {stable_mosaic.version = 11 : i64} {
  func.func @_upsample_conv_kernel(%arg0: i32, %arg1: i32, %arg2: memref<1x4x128xf32, #tpu.memory_space<vmem>>, %arg3: memref<2x4xf32, #tpu.memory_space<vmem>>, %arg4: memref<2x1xf32, #tpu.memory_space<vmem>>, %arg5: memref<2x1xf32, #tpu.memory_space<vmem>>, %arg6: memref<128x512xf32, #tpu.memory_space<vmem>>, %arg7: memref<1x2x512xf32, #tpu.memory_space<vmem>>) attributes {dimension_semantics = [#tpu.dimension_semantics<parallel>, #tpu.dimension_semantics<parallel>], iteration_bounds = array<i64: 2, 2>, scalar_prefetch = 0 : i64, scratch_operands = 0 : i64, tpu.core_type = #tpu.core_type<tc>, window_params = [{transform_indices = @transform_0, window_bounds = array<i64: 1, 4, 128>}, {pipeline_mode = #tpu.pipeline_mode<synchronous>, transform_indices = @transform_1, window_bounds = array<i64: 2, 4>}, {pipeline_mode = #tpu.pipeline_mode<synchronous>, transform_indices = @transform_2, window_bounds = array<i64: 2, 1>}, {pipeline_mode = #tpu.pipeline_mode<synchronous>, transform_indices = @transform_3, window_bounds = array<i64: 2, 1>}, {pipeline_mode = #tpu.pipeline_mode<synchronous>, transform_indices = @transform_4, window_bounds = array<i64: 128, 512>}, {transform_indices = @transform_5, window_bounds = array<i64: 1, 2, 512>}]} {
    %c0 = arith.constant 0 : index
    %c0_0 = arith.constant 0 : index
    %c0_1 = arith.constant 0 : index
    %0 = vector.load %arg2[%c0, %c0_0, %c0_1] : memref<1x4x128xf32, #tpu.memory_space<vmem>>, vector<1x4x128xf32>
    %1 = vector.shape_cast %0 : vector<1x4x128xf32> to vector<4x128xf32>
    %c0_2 = arith.constant 0 : index
    %c0_3 = arith.constant 0 : index
    %2 = vector.load %arg3[%c0_2, %c0_3] : memref<2x4xf32, #tpu.memory_space<vmem>>, vector<2x4xf32>
    %cst = arith.constant dense<0.000000e+00> : vector<2x128xf32>
    %3 = tpu.matmul %2, %1, %cst {dimension_numbers = #tpu.dot_dimension_numbers<[1], [0], [0], [1], [0, 0, 1, 1], [], []>} : vector<2x4xf32>, vector<4x128xf32>, vector<2x128xf32> -> vector<2x128xf32>
    %c0_4 = arith.constant 0 : index
    %c0_5 = arith.constant 0 : index
    %4 = vector.load %arg4[%c0_4, %c0_5] : memref<2x1xf32, #tpu.memory_space<vmem>>, vector<2x1xf32>
    %5 = vector.broadcast %4 : vector<2x1xf32> to vector<2x128xf32>
    %6 = arith.mulf %3, %5 : vector<2x128xf32>
    %c0_6 = arith.constant 0 : index
    %c0_7 = arith.constant 0 : index
    %7 = vector.load %arg5[%c0_6, %c0_7] : memref<2x1xf32, #tpu.memory_space<vmem>>, vector<2x1xf32>
    %8 = vector.broadcast %7 : vector<2x1xf32> to vector<2x128xf32>
    %9 = arith.addf %6, %8 : vector<2x128xf32>
    %cst_8 = arith.constant 1.000000e-01 : f32
    %10 = vector.broadcast %cst_8 : f32 to vector<2x128xf32>
    %11 = arith.mulf %10, %9 : vector<2x128xf32>
    %12 = arith.maximumf %9, %11 : vector<2x128xf32>
    %c0_9 = arith.constant 0 : index
    %c0_10 = arith.constant 0 : index
    %13 = vector.load %arg6[%c0_9, %c0_10] : memref<128x512xf32, #tpu.memory_space<vmem>>, vector<128x512xf32>
    %cst_11 = arith.constant dense<0.000000e+00> : vector<2x512xf32>
    %14 = tpu.matmul %12, %13, %cst_11 {dimension_numbers = #tpu.dot_dimension_numbers<[1], [0], [0], [1], [0, 0, 1, 1], [], []>} : vector<2x128xf32>, vector<128x512xf32>, vector<2x512xf32> -> vector<2x512xf32>
    %c0_12 = arith.constant 0 : index
    %c0_13 = arith.constant 0 : index
    %c0_14 = arith.constant 0 : index
    %15 = vector.load %arg7[%c0_12, %c0_13, %c0_14] : memref<1x2x512xf32, #tpu.memory_space<vmem>>, vector<1x2x512xf32>
    %16 = vector.shape_cast %15 : vector<1x2x512xf32> to vector<2x512xf32>
    %17 = vector.shape_cast %14 : vector<2x512xf32> to vector<1x2x512xf32>
    tpu.vector_store %arg7[%c0_12, %c0_13, %c0_14], %17 {strides = array<i32>} : memref<1x2x512xf32, #tpu.memory_space<vmem>>, vector<1x2x512xf32>,
    return
  }
  func.func @transform_0(%arg0: i32, %arg1: i32) -> (i32, i32, i32) {
    %c0_i32 = arith.constant 0 : i32
    %c0_i32_0 = arith.constant 0 : i32
    return %arg0, %c0_i32, %arg1 : i32, i32, i32
  }
  func.func @transform_1(%arg0: i32, %arg1: i32) -> (i32, i32) {
    %c0_i32 = arith.constant 0 : i32
    %c0_i32_0 = arith.constant 0 : i32
    %c0_i32_1 = arith.constant 0 : i32
    return %c0_i32, %c0_i32_0 : i32, i32
  }
  func.func @transform_2(%arg0: i32, %arg1: i32) -> (i32, i32) {
    %c0_i32 = arith.constant 0 : i32
    %c0_i32_0 = arith.constant 0 : i32
    %c0_i32_1 = arith.constant 0 : i32
    return %c0_i32, %c0_i32_0 : i32, i32
  }
  func.func @transform_3(%arg0: i32, %arg1: i32) -> (i32, i32) {
    %c0_i32 = arith.constant 0 : i32
    %c0_i32_0 = arith.constant 0 : i32
    %c0_i32_1 = arith.constant 0 : i32
    return %c0_i32, %c0_i32_0 : i32, i32
  }
  func.func @transform_4(%arg0: i32, %arg1: i32) -> (i32, i32) {
    %c0_i32 = arith.constant 0 : i32
    %c0_i32_0 = arith.constant 0 : i32
    %c0_i32_1 = arith.constant 0 : i32
    return %c0_i32, %c0_i32_0 : i32, i32
  }
  func.func @transform_5(%arg0: i32, %arg1: i32) -> (i32, i32, i32) {
    %c0_i32 = arith.constant 0 : i32
    %c0_i32_0 = arith.constant 0 : i32
    return %arg0, %c0_i32, %arg1 : i32, i32, i32
  }
}

</mosaic_0001>

<llo_original>
// kernel: tpu_custom_call.1
$region0: #{tpu_custom_call.1}
  #allocation0 [shape = 'u32[]', space=smem, size = 0x4, offset = 0x4, fixed_abs, tag = 'smem constant byte address 0x4 - core index']
  #allocation1 [shape = 'u32[72,128]{1,0:T(1,128)}', space=vmem, size = 0x9000, scoped, tag = 'internal scratch']
  %s0 = inlined_call_operand.hbm [shape: f32[2,4,256], index: 0, kind: input, shape index: {}]
  %s1 = inlined_call_operand.vmem [shape: f32[2,4], index: 1, kind: input, shape index: {}]
  %s2 = inlined_call_operand.vmem [shape: f32[2,1], index: 2, kind: input, shape index: {}]
  %s3 = inlined_call_operand.vmem [shape: f32[2,1], index: 3, kind: input, shape index: {}]
  %s4 = inlined_call_operand.hbm [shape: f32[128,512], index: 4, kind: input, shape index: {}]
  %s5 = inlined_call_operand.hbm [shape: f32[2,2,1024], index: 5, kind: output, shape index: {}]
  %s6 = sld [smem:[#allocation0]]
  $region61: #{tpu_custom_call.1} parent=0
    _
  %s8 = ssub.s32 1, %s6
  %s9 = scalar_select 0, %s8, %s6
  $region1: #{tpu_custom_call.1} parent=0
    #allocation2 [shape = 'u8[4096]{0}', space=vmem, size = 0x1000, scoped, tag = 'input window, operand 0']
    #allocation3 [shape = 's32[2]{0}', space=sflag, size = 0x8, scoped, tag = 'scoped memory for tpu_custom_call.1']
    #allocation4 [shape = 's32[2]{0}', space=sflag, size = 0x8, scoped, tag = 'scoped memory for tpu_custom_call.1']
    #allocation5 [shape = 'u8[262144]{0}', space=vmem, size = 0x40000, scoped, tag = 'input window, operand 4, single buffered']
    #allocation6 [shape = 's32[1]{0}', space=sflag, size = 0x4, scoped, tag = 'scoped memory for tpu_custom_call.1']
    #allocation7 [shape = 'u8[8192]{0}', space=vmem, size = 0x2000, scoped, tag = 'output window, operand 0']
    %10 = vsyncpa [#allocation3], 0
    %s11 = scalar_lea.sflag [#allocation3], 1
    %12 = vsyncpa %s11, 0
    %13 = vsyncpa [#allocation6], 0
    %14 = vsyncpa [#allocation4], 0
    %s15 = scalar_lea.sflag [#allocation4], 1
    %16 = vsyncpa %s15, 0
    loop: start=0, step=1, limit=6
    $region2: #{tpu_custom_call.1} parent=1 // loop_pre_header
      _
    $region3: #{tpu_custom_call.1} parent=1 // loop_header
      %s18 = sphi 0, %s22
      %p19 = scmp.ge.s32.totalorder %s18, 6
      %s25 = sphi 0, %s37
      %s26 = sphi 0, %s33
      %s27 = sphi 0, %s25
      %s28 = sphi 0, %s26
      %s29 = sphi 0, %s27
      %s30 = sphi 0, %s28
      %s42 = sphi 0, %s44
      %s45 = sphi 0, %s42
      %s46 = sphi 0, %s45
      %s62 = sphi 0, %s46
      %s66 = sphi 0, %s66
      %s68 = sphi 0, %s66
      %s69 = sphi 0, %s68
      %s83 = sphi 0, %s69
      %s87 = sphi 0, %s87
      %s89 = sphi 0, %s87
      %s90 = sphi 0, %s89
      %s104 = sphi 0, %s90
      %s108 = sphi 0, %s108
      %s110 = sphi 0, %s108
      %s111 = sphi 0, %s110
      %s125 = sphi 0, %s111
      %s129 = sphi 0, %s129
      %s131 = sphi 0, %s129
      %s132 = sphi 0, %s131
      %s146 = sphi 0, %s132
      %s154 = sphi 0, %s156
      %s157 = sphi 0, %s154
      %s158 = sphi 0, %s157
      %s174 = sphi 0, %s158
    $region4: #{tpu_custom_call.1} parent=1 // loop_header_branch
      %21 = sbr.rel (%p19) target = $region8
    $region5: #{tpu_custom_call.1} parent=1 // loop_body
      %s23 = ssub.s32 %s18, 1
      %s24 = ssub.s32 %s18, 2
      %s31 = sadd.s32 1, %s26
      %p32 = scmp.ge.s32.totalorder %s31, 2
      %s33 = scalar_select %p32, 0, %s31
      %s34 = sadd.s32 1, %s25
      %s35 = scalar_select %p32, %s34, %s25
      %p36 = scmp.ge.s32.totalorder %s35, 2
      %s37 = scalar_select %p36, 0, %s35
      %s38 = ssub.s32 %s25, %s37
      %s39 = ssub.s32 %s26, %s33
      %s40 = sor.u32 %s38, %s39
      %p41 = scmp.eq.s32.totalorder %s40, 0
      %s43 = sadd.s32 %s42, 1
      %s44 = scalar_select %p41, %s42, %s43
      %p47 = pneg %p41
      %p48 = scmp.eq.s32.totalorder %s18, 3
      %p49 = por %p47, %p48
      %p50 = scmp.ne.s32.totalorder %s42, %s45
      %p51 = scmp.eq.s32.totalorder %s18, 0
      %p52 = por %p50, %p51
      %p53 = scmp.ne.s32.totalorder %s42, %s45
      %p54 = scmp.eq.s32.totalorder %s23, 3
      %p55 = por %p53, %p54
      %p56 = scmp.ne.s32.totalorder %s45, %s46
      %p57 = scmp.eq.s32.totalorder %s23, 0
      %p58 = por %p56, %p57
      %p59 = scmp.ne.s32.totalorder %s45, %s46
      %p60 = scmp.eq.s32.totalorder %s24, 3
      %p61 = por %p59, %p60
      %p63 = scmp.ne.s32.totalorder %s46, %s62
      %p64 = scmp.eq.s32.totalorder %s24, 0
      %p65 = por %p63, %p64
      %s67 = sadd.s32 %s66, 1
      %p70 = scmp.eq.s32.totalorder %s18, 3
      %p71 = scmp.ne.s32.totalorder %s66, %s68
      %p72 = scmp.eq.s32.totalorder %s18, 0
      %p73 = por %p71, %p72
      %p74 = scmp.ne.s32.totalorder %s66, %s68
      %p75 = scmp.eq.s32.totalorder %s23, 3
      %p76 = por %p74, %p75
      %p77 = scmp.ne.s32.totalorder %s68, %s69
      %p78 = scmp.eq.s32.totalorder %s23, 0
      %p79 = por %p77, %p78
      %p80 = scmp.ne.s32.totalorder %s68, %s69
      %p81 = scmp.eq.s32.totalorder %s24, 3
      %p82 = por %p80, %p81
      %p84 = scmp.ne.s32.totalorder %s69, %s83
      %p85 = scmp.eq.s32.totalorder %s24, 0
      %p86 = por %p84, %p85
      %s88 = sadd.s32 %s87, 1
      %p91 = scmp.eq.s32.totalorder %s18, 3
      %p92 = scmp.ne.s32.totalorder %s87, %s89
      %p93 = scmp.eq.s32.totalorder %s18, 0
      %p94 = por %p92, %p93
      %p95 = scmp.ne.s32.totalorder %s87, %s89
      %p96 = scmp.eq.s32.totalorder %s23, 3
      %p97 = por %p95, %p96
      %p98 = scmp.ne.s32.totalorder %s89, %s90
      %p99 = scmp.eq.s32.totalorder %s23, 0
      %p100 = por %p98, %p99
      %p101 = scmp.ne.s32.totalorder %s89, %s90
      %p102 = scmp.eq.s32.totalorder %s24, 3
      %p103 = por %p101, %p102
      %p105 = scmp.ne.s32.totalorder %s90, %s104
      %p106 = scmp.eq.s32.totalorder %s24, 0
      %p107 = por %p105, %p106
      %s109 = sadd.s32 %s108, 1
      %p112 = scmp.eq.s32.totalorder %s18, 3
      %p113 = scmp.ne.s32.totalorder %s108, %s110
      %p114 = scmp.eq.s32.totalorder %s18, 0
      %p115 = por %p113, %p114
      %p116 = scmp.ne.s32.totalorder %s108, %s110
      %p117 = scmp.eq.s32.totalorder %s23, 3
      %p118 = por %p116, %p117
      %p119 = scmp.ne.s32.totalorder %s110, %s111
      %p120 = scmp.eq.s32.totalorder %s23, 0
      %p121 = por %p119, %p120
      %p122 = scmp.ne.s32.totalorder %s110, %s111
      %p123 = scmp.eq.s32.totalorder %s24, 3
      %p124 = por %p122, %p123
      %p126 = scmp.ne.s32.totalorder %s111, %s125
      %p127 = scmp.eq.s32.totalorder %s24, 0
      %p128 = por %p126, %p127
      %s130 = sadd.s32 %s129, 1
      %p133 = scmp.eq.s32.totalorder %s18, 3
      %p134 = scmp.ne.s32.totalorder %s129, %s131
      %p135 = scmp.eq.s32.totalorder %s18, 0
      %p136 = por %p134, %p135
      %p137 = scmp.ne.s32.totalorder %s129, %s131
      %p138 = scmp.eq.s32.totalorder %s23, 3
      %p139 = por %p137, %p138
      %p140 = scmp.ne.s32.totalorder %s131, %s132
      %p141 = scmp.eq.s32.totalorder %s23, 0
      %p142 = por %p140, %p141
      %p143 = scmp.ne.s32.totalorder %s131, %s132
      %p144 = scmp.eq.s32.totalorder %s24, 3
      %p145 = por %p143, %p144
      %p147 = scmp.ne.s32.totalorder %s132, %s146
      %p148 = scmp.eq.s32.totalorder %s24, 0
      %p149 = por %p147, %p148
      %s150 = ssub.s32 %s25, %s37
      %s151 = ssub.s32 %s26, %s33
      %s152 = sor.u32 %s150, %s151
      %p153 = scmp.eq.s32.totalorder %s152, 0
      %s155 = sadd.s32 %s154, 1
      %s156 = scalar_select %p153, %s154, %s155
      %p159 = pneg %p153
      %p160 = scmp.eq.s32.totalorder %s18, 3
      %p161 = por %p159, %p160
      %p162 = scmp.ne.s32.totalorder %s154, %s157
      %p163 = scmp.eq.s32.totalorder %s18, 0
      %p164 = por %p162, %p163
      %p165 = scmp.ne.s32.totalorder %s154, %s157
      %p166 = scmp.eq.s32.totalorder %s23, 3
      %p167 = por %p165, %p166
      %p168 = scmp.ne.s32.totalorder %s157, %s158
      %p169 = scmp.eq.s32.totalorder %s23, 0
      %p170 = por %p168, %p169
      %p171 = scmp.ne.s32.totalorder %s157, %s158
      %p172 = scmp.eq.s32.totalorder %s24, 3
      %p173 = por %p171, %p172
      %p175 = scmp.ne.s32.totalorder %s158, %s174
      %p176 = scmp.eq.s32.totalorder %s24, 0
      %p177 = por %p175, %p176
      %p178 = scmp.le.s32.totalorder 1, %s18
      %p179 = scmp.lt.s32.totalorder %s18, 5
      %p180 = pnand %p178, %p179
      %p181 = pneg %p180
      // Predicated region
      $region9: #{tpu_custom_call.1} parent=5 // pred_check
        _
      $region10: #{tpu_custom_call.1} parent=5 // pred_check_branch
        %183 = sbr.rel (%p180) target = $region12
      $region11: #{tpu_custom_call.1} parent=5 // pred_region
        %s184 = ssub.s32 %s18, 1
        // Predicated region
        $region13: #{tpu_custom_call.1} parent=11 // pred_check
          %p185 = pneg %p79
        $region14: #{tpu_custom_call.1} parent=11 // pred_check_branch
          %187 = sbr.rel (%p185) target = $region16
        $region15: #{tpu_custom_call.1} parent=11 // pred_region
          _
        $region16: #{tpu_custom_call.1} parent=11 // pred_fallthru
          _
        // Predicated region
        $region17: #{tpu_custom_call.1} parent=11 // pred_check
          %p188 = pneg %p100
        $region18: #{tpu_custom_call.1} parent=11 // pred_check_branch
          %190 = sbr.rel (%p188) target = $region20
        $region19: #{tpu_custom_call.1} parent=11 // pred_region
          _
        $region20: #{tpu_custom_call.1} parent=11 // pred_fallthru
          _
        // Predicated region
        $region21: #{tpu_custom_call.1} parent=11 // pred_check
          %p191 = pneg %p121
        $region22: #{tpu_custom_call.1} parent=11 // pred_check_branch
          %193 = sbr.rel (%p191) target = $region24
        $region23: #{tpu_custom_call.1} parent=11 // pred_region
          _
        $region24: #{tpu_custom_call.1} parent=11 // pred_fallthru
          _
        // Predicated region
        $region25: #{tpu_custom_call.1} parent=11 // pred_check
          %p194 = pneg %p142
        $region26: #{tpu_custom_call.1} parent=11 // pred_check_branch
          %196 = sbr.rel (%p194) target = $region28
        $region27: #{tpu_custom_call.1} parent=11 // pred_region
          %198 = vsyncadd [#allocation6], 0
          %s199 = sshll.u32 %s4, 4
          %s200 = int_to_ptr.hbm [resolvable:$true] %s199
          %s201 = sshll.u32 [#allocation5], 4
          %s202 = int_to_ptr.vmem [resolvable:$true] %s201
          %207 = dma.hbm_to_vmem [thread:$0]  %s200, 8192, %s202, [#allocation6], 512, 512, 32
        $region28: #{tpu_custom_call.1} parent=11 // pred_fallthru
          _
      $region12: #{tpu_custom_call.1} parent=5 // pred_fallthru
        _
      %p208 = scmp.lt.s32.totalorder %s18, 4
      // Predicated region
      $region29: #{tpu_custom_call.1} parent=5 // pred_check
        %p209 = pneg %p208
      $region30: #{tpu_custom_call.1} parent=5 // pred_check_branch
        %211 = sbr.rel (%p209) target = $region32
      $region31: #{tpu_custom_call.1} parent=5 // pred_region
        // Predicated region
        $region33: #{tpu_custom_call.1} parent=31 // pred_check
          %p212 = pneg %p52
        $region34: #{tpu_custom_call.1} parent=31 // pred_check_branch
          %214 = sbr.rel (%p212) target = $region36
        $region35: #{tpu_custom_call.1} parent=31 // pred_region
          %s215 = sand.u32 %s42, 1
          %s216 = scalar_lea.sflag [#allocation3], %s215
          %s217 = sand.u32 %s42, 1
          %s218 = smul.addr %s217, 4
          %s219 = scalar_lea.vmem [#allocation2], %s218
          %221 = vsyncadd %s216, 0
          %s222 = smul.addr %s25, 2
          %s223 = sadd.s32 %s26, %s222
          %s224 = smul.addr %s223, 4
          %s225 = scalar_lea.hbm %s0, %s224
          %s227 = sshll.u32 %s225, 4
          %s228 = int_to_ptr.hbm [resolvable:$true] %s227
          %s229 = sshll.u32 %s219, 4
          %s230 = int_to_ptr.vmem [resolvable:$true] %s229
          %232 = dma.hbm_to_vmem [thread:$0]  %s228, 64, %s230, %s216
        $region36: #{tpu_custom_call.1} parent=31 // pred_fallthru
          _
      $region32: #{tpu_custom_call.1} parent=5 // pred_fallthru
        _
      %p233 = scmp.le.s32.totalorder 1, %s18
      %p234 = scmp.lt.s32.totalorder %s18, 5
      %p235 = pnand %p233, %p234
      %p236 = pneg %p235
      // Predicated region
      $region37: #{tpu_custom_call.1} parent=5 // pred_check
        _
      $region38: #{tpu_custom_call.1} parent=5 // pred_check_branch
        %238 = sbr.rel (%p235) target = $region40
      $region39: #{tpu_custom_call.1} parent=5 // pred_region
        %s239 = ssub.s32 %s18, 1
        %s240 = sand.u32 %s45, 1
        %s241 = scalar_lea.sflag [#allocation3], %s240
        %s242 = sand.u32 %s45, 1
        %s243 = smul.addr %s242, 4
        %s244 = scalar_lea.vmem [#allocation2], %s243
        // Predicated region
        $region41: #{tpu_custom_call.1} parent=39 // pred_check
          %p245 = pneg %p58
        $region42: #{tpu_custom_call.1} parent=39 // pred_check_branch
          %247 = sbr.rel (%p245) target = $region44
        $region43: #{tpu_custom_call.1} parent=39 // pred_region
          %249 = dma.done %s241, 64
        $region44: #{tpu_custom_call.1} parent=39 // pred_fallthru
          _
        // Predicated region
        $region45: #{tpu_custom_call.1} parent=39 // pred_check
          %p250 = pneg %p142
        $region46: #{tpu_custom_call.1} parent=39 // pred_check_branch
          %252 = sbr.rel (%p250) target = $region48
        $region47: #{tpu_custom_call.1} parent=39 // pred_region
          %254 = dma.done [#allocation6], 8192
        $region48: #{tpu_custom_call.1} parent=39 // pred_fallthru
          _
        %s255 = sand.u32 %s45, 1
        %s256 = scalar_lea.sflag [#allocation3], %s255
        %s257 = sand.u32 %s45, 1
        %s258 = smul.addr %s257, 4
        %s259 = scalar_lea.vmem [#allocation2], %s258
        %p260 = pneg %p58
        %p261 = pneg %p55
        %p262 = pneg %p79
        %p263 = pneg %p76
        %p264 = pneg %p100
        %p265 = pneg %p97
        %p266 = pneg %p121
        %p267 = pneg %p118
        %p268 = pneg %p142
        %p269 = pneg %p139
        %p270 = pneg %p170
        %p271 = pneg %p167
        %s272 = sand.u32 %s157, 1
        %s273 = scalar_lea.sflag [#allocation4], %s272
        %s274 = sand.u32 %s157, 1
        %s275 = smul.addr %s274, 8
        %s276 = scalar_lea.vmem [#allocation7], %s275
        %s277 = smul.u32 4, %s28
        %v278 = vld [vmem:[%s244] sm:$0xf]
        %v279 = vld [vmem:[%s1] sm:$0x3]
        %vm280 = vcmask 31744
        %v282 = vsel %vm280, %v279, 0
        %vm284 = vcmask 1043456
        %v286 = vsel %vm284, %v278, 0
        %288 = vmatpush.msra.mxu0 0.0
        %289 = vmatpush.msra.mxu0 0.0
        %290 = vmatpush.msra.mxu0 0.0
        %291 = vmatpush.msra.mxu0 0.0
        %292 = vmatpush.msra.mxu0 0.0
        %293 = vmatpush.msra.mxu0 0.0
        %294 = vmatpush.msra.mxu0 0.0
        %295 = vmatpush.msra.mxu0 0.0
        %296 = vmatpush.msra.mxu0 0.0
        %297 = vmatpush.msra.mxu0 0.0
        %298 = vmatpush.msra.mxu0 0.0
        %299 = vmatpush.msra.mxu0 0.0
        %300 = vmatpush.msra.mxu0 0.0
        %301 = vmatpush.msra.mxu0 0.0
        %302 = vmatpush.msra.mxu0 0.0
        %303 = vmatpush.msra.mxu0 %v286
        %304 = vmatmul.f32.gmra.mxu0 %v282
        %v305 = vpop.f32.mrf.mxu0
        %v306 = vadd.f32 0.0, %v305
        %307 = vdwg.mxu0
        %v308 = vld [vmem:[%s2] sm:$0x3]
        %310 = vset.pattern.permute.xlu0 0
        %311 = vperm.xlu0 %310, %v308
        %v312 = vpop.permute.xlu0 %311
        %v314 = vmul.f32 %v306, %v312
        %v315 = vld [vmem:[%s3] sm:$0x3]
        %317 = vset.pattern.permute.xlu0 0
        %318 = vperm.xlu0 %317, %v315
        %v319 = vpop.permute.xlu0 %318
        %v321 = vadd.f32 %v314, %v319
        %v322 = vmul.f32 %v321, 0.1
        %v323 = vmax.f32 %v321, %v322
        %v324 = vld [vmem:[#allocation5] sm:$0xff]
        %v325 = vld [vmem:[#allocation5 + $0x8] sm:$0xff]
        %v326 = vld [vmem:[#allocation5 + $0x10] sm:$0xff]
        %v327 = vld [vmem:[#allocation5 + $0x18] sm:$0xff]
        %v328 = vld [vmem:[#allocation5 + $0x20] sm:$0xff]
        %v329 = vld [vmem:[#allocation5 + $0x28] sm:$0xff]
        %v330 = vld [vmem:[#allocation5 + $0x30] sm:$0xff]
        %v331 = vld [vmem:[#allocation5 + $0x38] sm:$0xff]
        %v332 = vld [vmem:[#allocation5 + $0x40] sm:$0xff]
        %v333 = vld [vmem:[#allocation5 + $0x48] sm:$0xff]
        %v334 = vld [vmem:[#allocation5 + $0x50] sm:$0xff]
        %v335 = vld [vmem:[#allocation5 + $0x58] sm:$0xff]
        %v336 = vld [vmem:[#allocation5 + $0x60] sm:$0xff]
        %v337 = vld [vmem:[#allocation5 + $0x68] sm:$0xff]
        %v338 = vld [vmem:[#allocation5 + $0x70] sm:$0xff]
        %v339 = vld [vmem:[#allocation5 + $0x78] sm:$0xff]
        %v340 = vld [vmem:[#allocation5 + $0x80] sm:$0xff]
        %v341 = vld [vmem:[#allocation5 + $0x88] sm:$0xff]
        %v342 = vld [vmem:[#allocation5 + $0x90] sm:$0xff]
        %v343 = vld [vmem:[#allocation5 + $0x98] sm:$0xff]
        %v344 = vld [vmem:[#allocation5 + $0xa0] sm:$0xff]
        %v345 = vld [vmem:[#allocation5 + $0xa8] sm:$0xff]
        %v346 = vld [vmem:[#allocation5 + $0xb0] sm:$0xff]
        %v347 = vld [vmem:[#allocation5 + $0xb8] sm:$0xff]
        %v348 = vld [vmem:[#allocation5 + $0xc0] sm:$0xff]
        %v349 = vld [vmem:[#allocation5 + $0xc8] sm:$0xff]
        %v350 = vld [vmem:[#allocation5 + $0xd0] sm:$0xff]
        %v351 = vld [vmem:[#allocation5 + $0xd8] sm:$0xff]
        %v352 = vld [vmem:[#allocation5 + $0xe0] sm:$0xff]
        %v353 = vld [vmem:[#allocation5 + $0xe8] sm:$0xff]
        %v354 = vld [vmem:[#allocation5 + $0xf0] sm:$0xff]
        %v355 = vld [vmem:[#allocation5 + $0xf8] sm:$0xff]
        %v356 = vld [vmem:[#allocation5 + $0x100] sm:$0xff]
        %v357 = vld [vmem:[#allocation5 + $0x108] sm:$0xff]
        %v358 = vld [vmem:[#allocation5 + $0x110] sm:$0xff]
        %v359 = vld [vmem:[#allocation5 + $0x118] sm:$0xff]
        %v360 = vld [vmem:[#allocation5 + $0x120] sm:$0xff]
        %v361 = vld [vmem:[#allocation5 + $0x128] sm:$0xff]
        %v362 = vld [vmem:[#allocation5 + $0x130] sm:$0xff]
        %v363 = vld [vmem:[#allocation5 + $0x138] sm:$0xff]
        %v364 = vld [vmem:[#allocation5 + $0x140] sm:$0xff]
        %v365 = vld [vmem:[#allocation5 + $0x148] sm:$0xff]
        %v366 = vld [vmem:[#allocation5 + $0x150] sm:$0xff]
        %v367 = vld [vmem:[#allocation5 + $0x158] sm:$0xff]
        %v368 = vld [vmem:[#allocation5 + $0x160] sm:$0xff]
        %v369 = vld [vmem:[#allocation5 + $0x168] sm:$0xff]
        %v370 = vld [vmem:[#allocation5 + $0x170] sm:$0xff]
        %v371 = vld [vmem:[#allocation5 + $0x178] sm:$0xff]
        %v372 = vld [vmem:[#allocation5 + $0x180] sm:$0xff]
        %v373 = vld [vmem:[#allocation5 + $0x188] sm:$0xff]
        %v374 = vld [vmem:[#allocation5 + $0x190] sm:$0xff]
        %v375 = vld [vmem:[#allocation5 + $0x198] sm:$0xff]
        %v376 = vld [vmem:[#allocation5 + $0x1a0] sm:$0xff]
        %v377 = vld [vmem:[#allocation5 + $0x1a8] sm:$0xff]
        %v378 = vld [vmem:[#allocation5 + $0x1b0] sm:$0xff]
        %v379 = vld [vmem:[#allocation5 + $0x1b8] sm:$0xff]
        %v380 = vld [vmem:[#allocation5 + $0x1c0] sm:$0xff]
        %v381 = vld [vmem:[#allocation5 + $0x1c8] sm:$0xff]
        %v382 = vld [vmem:[#allocation5 + $0x1d0] sm:$0xff]
        %v383 = vld [vmem:[#allocation5 + $0x1d8] sm:$0xff]
        %v384 = vld [vmem:[#allocation5 + $0x1e0] sm:$0xff]
        %v385 = vld [vmem:[#allocation5 + $0x1e8] sm:$0xff]
        %v386 = vld [vmem:[#allocation5 + $0x1f0] sm:$0xff]
        %v387 = vld [vmem:[#allocation5 + $0x1f8] sm:$0xff]
        %388 = vmatpush.msra.mxu0 %v384
        %389 = vmatpush.msra.mxu0 %v380
        %390 = vmatpush.msra.mxu0 %v376
        %391 = vmatpush.msra.mxu0 %v372
        %392 = vmatpush.msra.mxu0 %v368
        %393 = vmatpush.msra.mxu0 %v364
        %394 = vmatpush.msra.mxu0 %v360
        %395 = vmatpush.msra.mxu0 %v356
        %396 = vmatpush.msra.mxu0 %v352
        %397 = vmatpush.msra.mxu0 %v348
        %398 = vmatpush.msra.mxu0 %v344
        %399 = vmatpush.msra.mxu0 %v340
        %400 = vmatpush.msra.mxu0 %v336
        %401 = vmatpush.msra.mxu0 %v332
        %402 = vmatpush.msra.mxu0 %v328
        %403 = vmatpush.msra.mxu0 %v324
        %404 = vmatmul.f32.gmra.mxu0 %v323
        %v405 = vpop.f32.mrf.mxu0
        %v406 = vadd.f32 0.0, %v405
        %407 = vdwg.mxu0
        %408 = vmatpush.msra.mxu0 %v385
        %409 = vmatpush.msra.mxu0 %v381
        %410 = vmatpush.msra.mxu0 %v377
        %411 = vmatpush.msra.mxu0 %v373
        %412 = vmatpush.msra.mxu0 %v369
        %413 = vmatpush.msra.mxu0 %v365
        %414 = vmatpush.msra.mxu0 %v361
        %415 = vmatpush.msra.mxu0 %v357
        %416 = vmatpush.msra.mxu0 %v353
        %417 = vmatpush.msra.mxu0 %v349
        %418 = vmatpush.msra.mxu0 %v345
        %419 = vmatpush.msra.mxu0 %v341
        %420 = vmatpush.msra.mxu0 %v337
        %421 = vmatpush.msra.mxu0 %v333
        %422 = vmatpush.msra.mxu0 %v329
        %423 = vmatpush.msra.mxu0 %v325
        %424 = vmatmul.f32.gmra.mxu0 %v323
        %v425 = vpop.f32.mrf.mxu0
        %v426 = vadd.f32 0.0, %v425
        %427 = vdwg.mxu0
        %428 = vmatpush.msra.mxu0 %v386
        %429 = vmatpush.msra.mxu0 %v382
        %430 = vmatpush.msra.mxu0 %v378
        %431 = vmatpush.msra.mxu0 %v374
        %432 = vmatpush.msra.mxu0 %v370
        %433 = vmatpush.msra.mxu0 %v366
        %434 = vmatpush.msra.mxu0 %v362
        %435 = vmatpush.msra.mxu0 %v358
        %436 = vmatpush.msra.mxu0 %v354
        %437 = vmatpush.msra.mxu0 %v350
        %438 = vmatpush.msra.mxu0 %v346
        %439 = vmatpush.msra.mxu0 %v342
        %440 = vmatpush.msra.mxu0 %v338
        %441 = vmatpush.msra.mxu0 %v334
        %442 = vmatpush.msra.mxu0 %v330
        %443 = vmatpush.msra.mxu0 %v326
        %444 = vmatmul.f32.gmra.mxu0 %v323
        %v445 = vpop.f32.mrf.mxu0
        %v446 = vadd.f32 0.0, %v445
        %447 = vdwg.mxu0
        %448 = vmatpush.msra.mxu0 %v387
        %449 = vmatpush.msra.mxu0 %v383
        %450 = vmatpush.msra.mxu0 %v379
        %451 = vmatpush.msra.mxu0 %v375
        %452 = vmatpush.msra.mxu0 %v371
        %453 = vmatpush.msra.mxu0 %v367
        %454 = vmatpush.msra.mxu0 %v363
        %455 = vmatpush.msra.mxu0 %v359
        %456 = vmatpush.msra.mxu0 %v355
        %457 = vmatpush.msra.mxu0 %v351
        %458 = vmatpush.msra.mxu0 %v347
        %459 = vmatpush.msra.mxu0 %v343
        %460 = vmatpush.msra.mxu0 %v339
        %461 = vmatpush.msra.mxu0 %v335
        %462 = vmatpush.msra.mxu0 %v331
        %463 = vmatpush.msra.mxu0 %v327
        %464 = vmatmul.f32.gmra.mxu0 %v323
        %v465 = vpop.f32.mrf.mxu0
        %v466 = vadd.f32 0.0, %v465
        %467 = vdwg.mxu0
        %v472 = vrot.slane %v426, 6
        %v473 = vrot.slane %v446, 4
        %v474 = vrot.slane %v466, 2
        %vm475 = vcmask 1041408
        %v476 = vsel %vm475, %v406, %v472
        %vm477 = vcmask 1045508
        %v478 = vsel %vm477, %v473, %v474
        %v479 = vsel %vm284, %v476, %v478
        %481 = vst [vmem:[%s276] sm:$0xff] %v479
        %s482 = sand.u32 %s157, 1
        %s483 = scalar_lea.sflag [#allocation4], %s482
        %s484 = sand.u32 %s157, 1
        %s485 = smul.addr %s484, 8
        %s486 = scalar_lea.vmem [#allocation7], %s485
        // Predicated region
        $region49: #{tpu_custom_call.1} parent=39 // pred_check
          %p487 = pneg %p167
        $region50: #{tpu_custom_call.1} parent=39 // pred_check_branch
          %489 = sbr.rel (%p487) target = $region52
        $region51: #{tpu_custom_call.1} parent=39 // pred_region
          %s490 = smul.u32 4, %s28
          %492 = vsyncadd %s483, 0
          %s493 = smul.addr %s27, 8
          %s494 = sadd.s32 %s490, %s493
          %s495 = smul.addr %s494, 2
          %s496 = scalar_lea.hbm %s5, %s495
          %s498 = sshll.u32 %s486, 4
          %s499 = int_to_ptr.vmem [resolvable:$true] %s498
          %s500 = sshll.u32 %s496, 4
          %s501 = int_to_ptr.hbm [resolvable:$true] %s500
          %503 = dma.vmem_to_hbm [thread:$0]  %s499, 128, %s501, %s483
        $region52: #{tpu_custom_call.1} parent=39 // pred_fallthru
          _
      $region40: #{tpu_custom_call.1} parent=5 // pred_fallthru
        _
      %p504 = scmp.le.s32.totalorder 2, %s18
      // Predicated region
      $region53: #{tpu_custom_call.1} parent=5 // pred_check
        %p505 = pneg %p504
      $region54: #{tpu_custom_call.1} parent=5 // pred_check_branch
        %507 = sbr.rel (%p505) target = $region56
      $region55: #{tpu_custom_call.1} parent=5 // pred_region
        %s508 = ssub.s32 %s18, 2
        // Predicated region
        $region57: #{tpu_custom_call.1} parent=55 // pred_check
          %p509 = pneg %p173
        $region58: #{tpu_custom_call.1} parent=55 // pred_check_branch
          %511 = sbr.rel (%p509) target = $region60
        $region59: #{tpu_custom_call.1} parent=55 // pred_region
          %s512 = sand.u32 %s158, 1
          %s513 = scalar_lea.sflag [#allocation4], %s512
          %s514 = sand.u32 %s158, 1
          %s515 = smul.addr %s514, 8
          %s516 = scalar_lea.vmem [#allocation7], %s515
          %518 = dma.done %s513, 128
        $region60: #{tpu_custom_call.1} parent=55 // pred_fallthru
          _
      $region56: #{tpu_custom_call.1} parent=5 // pred_fallthru
        _
    $region6: #{tpu_custom_call.1} parent=1 // loop_footer
      %s22 = sadd.s32 1, %s18
    $region7: #{tpu_custom_call.1} parent=1 // loop_footer_branch
      %17 = sbr.rel target = $region3
    $region8: #{tpu_custom_call.1} parent=1 // loop_exit
      _
    %519 = vsyncpa [#allocation3], 1
    %s520 = scalar_lea.sflag [#allocation3], 1
    %521 = vsyncpa %s520, 1
    %522 = vsyncpa [#allocation6], 1
    %523 = vsyncpa [#allocation4], 1
    %s524 = scalar_lea.sflag [#allocation4], 1
    %525 = vsyncpa %s524, 1

</llo_original>
